<compile_context>
chip_gen: v7x
topology: tpu7x:2x2x1
jax: 0.10.0
libtpu: 0.0.40
codegen_flags: <defaults>
</compile_context>

<pallas_src>
import functools

import jax
import jax.numpy as jnp
from jax import lax
from jax.experimental import pallas as pl
from jax.experimental.pallas import tpu as pltpu


_MIB = 1024 * 1024
_PARTIAL_BLOCK = (8, 128)            # lane-dense f32 tile each core accumulates into
_TARGET_BLOCK_BYTES = 2 * _MIB       # ~2 MiB pred block -> near HBM roofline


def _round_up(x: int, m: int) -> int:
    return ((x + m - 1) // m) * m


def _tpu_params():
    """(num TensorCores per chip, physical VMEM bytes) with safe fallbacks."""
    cores, vmem_cap = 1, 64 * _MIB        # conservative: single TC, v7x VMEM floor
    try:
        info = pltpu.get_tpu_info()
        v = getattr(info, "vmem_capacity_bytes", None)
        if isinstance(v, int) and v > 0:
            vmem_cap = v
        for attr in ("num_cores", "num_tensorcores", "tensorcore_count",
                     "core_count"):
            n = getattr(info, attr, None)
            if isinstance(n, int) and 1 <= n <= 8:
                cores = n
                break
    except Exception:
        # Unknown jaxlib / non-TPU tracer: keep conservative defaults.
        pass
    return cores, vmem_cap


def _row_tiling(batch, n_cls, pred_itemsize, extra_itemsize, num_cores):
    """Pick batch tile, grid extents and the padded class width."""
    c_pad = _round_up(max(n_cls, 1), 128)          # lane padding in VMEM
    sub = 16 if pred_itemsize < 4 else 8            # sublane packing granule
    bytes_per_row = c_pad * (pred_itemsize + extra_itemsize)
    if batch < sub:
        tb = batch                                   # full-dim block is always legal
    else:
        tb = (_TARGET_BLOCK_BYTES // max(1, bytes_per_row)) // sub * sub
        tb = max(sub, tb)
        tb = min(tb, (batch // sub) * sub)
    total_tiles = pl.cdiv(batch, tb)
    splits = max(1, min(num_cores, total_tiles))     # no wasted clamped tiles
    steps = pl.cdiv(total_tiles, splits)
    return tb, total_tiles, steps, splits, c_pad


def _vmem_limit(tb, c_pad, pred_itemsize, extra_itemsize, vmem_cap):
    blk = tb * c_pad
    need = 2 * blk * pred_itemsize           # double-buffered pred
    need += 2 * blk * extra_itemsize         # double-buffered dense target
    need += 5 * blk * 4                      # f32 working set (upcast/exp/selects)
    need += 2 * _MIB                         # labels, output block, misc headroom
    cap = min(vmem_cap, max(32 * _MIB, (vmem_cap * 3) // 4))
    return int(min(cap, max(32 * _MIB, need)))


def _tile_index_map(steps: int, total_tiles: int):
    # Clamp so fully-out-of-range (core, step) pairs re-read the last real tile;
    # their rows are masked out of row_loss inside the kernel.
    def index_map(c, i):
        t = jnp.minimum(c * steps + i, total_tiles - 1)
        return (t, 0)
    return index_map


def _ls_labels_kernel(tgt_ref, pred_ref, out_ref, *, batch, tile_b, steps,
                      confidence, fill):
    c = pl.program_id(0)
    i = pl.program_id(1)

    @pl.when(i == 0)
    def _init():
        out_ref[...] = jnp.zeros_like(out_ref)

    # Global row ids of this tile (un-clamped) -> mask rows past the true batch.
    tile_idx = c * steps + i
    row0 = tile_idx * tile_b

    p = pred_ref[...].astype(jnp.float32)                        # (TB, C)
    tb, n_cls = p.shape
    row_ids = row0 + lax.broadcasted_iota(jnp.int32, (tb, 1), 0)
    valid = row_ids < batch                                      # (TB, 1)

    # Stable log-softmax statistics; logp itself is never materialized.
    m = jnp.max(p, axis=1, keepdims=True)                        # (TB, 1)
    lse = jnp.log(jnp.sum(jnp.exp(p - m), axis=1, keepdims=True))
    z = m + lse                                                  # log sum_j exp(p_j)

    # Smoothed one-hot weights applied on the fly from the integer labels.
    tgt = tgt_ref[...]                                           # (TB, 1) int32
    cls_ids = lax.broadcasted_iota(jnp.int32, (tb, n_cls), 1)
    hit = cls_ids == tgt                                         # (TB, C)
    p_t = jnp.sum(jnp.where(hit, p, 0.0), axis=1, keepdims=True)
    p_sum = jnp.sum(p, axis=1, keepdims=True)

    logp_t = p_t - z
    logp_sum = p_sum - jnp.float32(n_cls) * z
    row_loss = -((confidence - fill) * logp_t + fill * logp_sum)
    row_loss = jnp.where(valid, row_loss, 0.0)

    # Accumulate this core's partial sum into its revisited (8,128) output block.
    out_ref[...] += jnp.sum(row_loss, axis=0, keepdims=True)


def _ls_dense_kernel(pred_ref, dist_ref, out_ref, *, batch, tile_b, steps):
    c = pl.program_id(0)
    i = pl.program_id(1)

    @pl.when(i == 0)
    def _init():
        out_ref[...] = jnp.zeros_like(out_ref)

    tile_idx = c * steps + i
    row0 = tile_idx * tile_b

    p = pred_ref[...].astype(jnp.float32)                        # (TB, C)
    d = dist_ref[...].astype(jnp.float32)                        # (TB, C)
    tb, _ = p.shape
    row_ids = row0 + lax.broadcasted_iota(jnp.int32, (tb, 1), 0)
    valid = row_ids < batch                                      # (TB, 1)

    m = jnp.max(p, axis=1, keepdims=True)
    lse = jnp.log(jnp.sum(jnp.exp(p - m), axis=1, keepdims=True))
    z = m + lse

    # -sum(d * logp) = -(sum(d*p) - z * sum(d)); logp never materialized.
    dp = jnp.sum(d * p, axis=1, keepdims=True)
    d_sum = jnp.sum(d, axis=1, keepdims=True)
    row_loss = -(dp - z * d_sum)
    row_loss = jnp.where(valid, row_loss, 0.0)

    out_ref[...] += jnp.sum(row_loss, axis=0, keepdims=True)


def smooth_one_hot(target: jax.Array, num_classes: int, smoothing: float = 0.0):
    """JAX equivalent of the PyTorch smooth_one_hot helper (reference / glue)."""
    assert 0 <= smoothing < 1
    confidence = 1.0 - smoothing
    fill = smoothing / (num_classes - 1) if num_classes > 1 else 0.0
    one_hot = jax.nn.one_hot(target, num_classes, dtype=jnp.float32)
    return one_hot * confidence + (1.0 - one_hot) * fill


@functools.partial(jax.jit, static_argnames=("num_classes", "smoothing"))
def label_smoothing_loss(pred: jax.Array, target: jax.Array,
                         num_classes: int, smoothing: float = 0.0):
    """Forward pass of LabelSmoothingLoss(num_classes, smoothing)."""
    assert 0 <= smoothing < 1
    batch, n_cls = pred.shape
    assert n_cls == num_classes

    num_cores, vmem_cap = _tpu_params()
    dense = target.ndim == 2
    pred_itemsize = pred.dtype.itemsize
    extra_itemsize = target.dtype.itemsize if dense else 0

    tb, total_tiles, steps, splits, c_pad = _row_tiling(
        batch, n_cls, pred_itemsize, extra_itemsize, num_cores)
    grid = (splits, steps)
    tile_map = _tile_index_map(steps, total_tiles)
    out_shape = jax.ShapeDtypeStruct(
        (splits * _PARTIAL_BLOCK[0], _PARTIAL_BLOCK[1]), jnp.float32)
    out_spec = pl.BlockSpec(_PARTIAL_BLOCK, lambda c, i: (c, 0))
    cparams = pltpu.CompilerParams(
        dimension_semantics=("parallel", "arbitrary"),
        vmem_limit_bytes=_vmem_limit(tb, c_pad, pred_itemsize, extra_itemsize,
                                     vmem_cap))
    out_bytes = splits * _PARTIAL_BLOCK[0] * _PARTIAL_BLOCK[1] * 4

    if dense:
        # Dense (B, C) target distribution (PyTorch's 2-D target branch).
        cost = pl.CostEstimate(
            flops=6 * batch * n_cls,
            transcendentals=batch * n_cls + batch,
            bytes_accessed=batch * n_cls * (pred_itemsize + extra_itemsize)
            + out_bytes)
        kernel = functools.partial(_ls_dense_kernel, batch=batch, tile_b=tb,
                                   steps=steps)
        partials = pl.pallas_call(
            kernel,
            out_shape=out_shape,
            grid_spec=pltpu.PrefetchScalarGridSpec(
                num_scalar_prefetch=0,
                grid=grid,
                in_specs=[pl.BlockSpec((tb, n_cls), tile_map),
                          pl.BlockSpec((tb, n_cls), tile_map)],
                out_specs=out_spec),
            compiler_params=cparams,
            cost_estimate=cost,
        )(pred, target)
    else:
        # Integer-label path: smoothing weights computed in-kernel, no dense
        # one-hot distribution ever written to HBM.
        confidence = 1.0 - smoothing
        fill = smoothing / (num_classes - 1) if num_classes > 1 else 0.0
        tgt2d = target.astype(jnp.int32).reshape(batch, 1)
        cost = pl.CostEstimate(
            flops=6 * batch * n_cls,
            transcendentals=batch * n_cls + batch,
            bytes_accessed=batch * n_cls * pred_itemsize + batch * 4 + out_bytes)
        kernel = functools.partial(_ls_labels_kernel, batch=batch, tile_b=tb,
                                   steps=steps, confidence=confidence, fill=fill)
        partials = pl.pallas_call(
            kernel,
            out_shape=out_shape,
            grid_spec=pltpu.PrefetchScalarGridSpec(
                num_scalar_prefetch=0,
                grid=grid,
                in_specs=[pl.BlockSpec((tb, 1), tile_map),
                          pl.BlockSpec((tb, n_cls), tile_map)],
                out_specs=out_spec),
            compiler_params=cparams,
            cost_estimate=cost,
        )(tgt2d, pred)

    # Each core's (8,128) output block is broadcast-filled with its partial sum.
    per_core = partials[:: _PARTIAL_BLOCK[0], 0]
    return jnp.sum(per_core) / jnp.float32(batch)


if __name__ == "__main__":
    num_classes = 128   # lane-dense class dim
    smoothing = 0.1

    key = jax.random.PRNGKey(0)
    k1, k2, k3, k4 = jax.random.split(key, 4)

    # ---- integer-label path, bf16 pred (kernel upcasts to f32) -------------
    batch = 8
    pred = jax.random.normal(k1, (batch, num_classes),
                             dtype=jnp.float32).astype(jnp.bfloat16)
    target = jax.random.randint(k2, (batch,), 0, num_classes, dtype=jnp.int32)

    loss = label_smoothing_loss(pred, target, num_classes=num_classes,
                                smoothing=smoothing)
    loss = jax.block_until_ready(loss)

    pred_f32 = pred.astype(jnp.float32)
    logp_ref = jax.nn.log_softmax(pred_f32, axis=1)
    dist_ref = smooth_one_hot(target, num_classes, smoothing)
    loss_ref = jnp.sum(-logp_ref * dist_ref) / batch
    assert jnp.allclose(loss, loss_ref, atol=1e-4, rtol=1e-4), (loss, loss_ref)

    # ---- dense (B, C) target path -------------------------------------------
    loss_dense = label_smoothing_loss(pred, dist_ref, num_classes=num_classes,
                                      smoothing=smoothing)
    loss_dense = jax.block_until_ready(loss_dense)
    assert jnp.allclose(loss_dense, loss_ref, atol=1e-4, rtol=1e-4), (
        loss_dense, loss_ref)

    # ---- f32 pred with a partial last row-tile (exercises row masking) ------
    batch2 = 36
    pred2 = jax.random.normal(k3, (batch2, num_classes), dtype=jnp.float32)
    target2 = jax.random.randint(k4, (batch2,), 0, num_classes, dtype=jnp.int32)
    loss2 = label_smoothing_loss(pred2, target2, num_classes=num_classes,
                                 smoothing=smoothing)
    loss2 = jax.block_until_ready(loss2)
    logp2 = jax.nn.log_softmax(pred2, axis=1)
    dist2 = smooth_one_hot(target2, num_classes, smoothing)
    loss2_ref = jnp.sum(-logp2 * dist2) / batch2
    assert jnp.allclose(loss2, loss2_ref, atol=1e-4, rtol=1e-4), (loss2, loss2_ref)

    print("KERNEL_OK")
</pallas_src>

<mosaic_0001>
module attributes {stable_mosaic.version = 11 : i64} {
  func.func @_ls_labels_kernel(%arg0: i32, %arg1: i32, %arg2: memref<8x1xi32, #tpu.memory_space<vmem>>, %arg3: memref<8x128xbf16, #tpu.memory_space<vmem>>, %arg4: memref<8x128xf32, #tpu.memory_space<vmem>>) attributes {dimension_semantics = [#tpu.dimension_semantics<parallel>, #tpu.dimension_semantics<arbitrary>], iteration_bounds = array<i64: 1, 1>, scalar_prefetch = 0 : i64, scratch_operands = 0 : i64, tpu.core_type = #tpu.core_type<tc>, window_params = [{transform_indices = @transform_0, window_bounds = array<i64: 8, 1>}, {transform_indices = @transform_1, window_bounds = array<i64: 8, 128>}, {transform_indices = @transform_2, window_bounds = array<i64: 8, 128>}]} {
    %c0_i32 = arith.constant 0 : i32
    %0 = arith.cmpi eq, %arg1, %c0_i32 : i32
    %1 = arith.extui %0 : i1 to i32
    %c0_i32_0 = arith.constant 0 : i32
    %2 = arith.cmpi ne, %1, %c0_i32_0 : i32
    scf.if %2 {
      %cst_19 = arith.constant 0.000000e+00 : f32
      %51 = vector.broadcast %cst_19 : f32 to vector<8x128xf32>
      %c0_20 = arith.constant 0 : index
      %c0_21 = arith.constant 0 : index
      %52 = vector.load %arg4[%c0_20, %c0_21] : memref<8x128xf32, #tpu.memory_space<vmem>>, vector<8x128xf32>
      tpu.vector_store %arg4[%c0_20, %c0_21], %51 {strides = array<i32>} : memref<8x128xf32, #tpu.memory_space<vmem>>, vector<8x128xf32>,
    } else {
    }
    %c1_i32 = arith.constant 1 : i32
    %3 = arith.muli %arg0, %c1_i32 : i32
    %4 = arith.addi %3, %arg1 : i32
    %c8_i32 = arith.constant 8 : i32
    %5 = arith.muli %4, %c8_i32 : i32
    %c0 = arith.constant 0 : index
    %c0_1 = arith.constant 0 : index
    %6 = vector.load %arg3[%c0, %c0_1] : memref<8x128xbf16, #tpu.memory_space<vmem>>, vector<8x128xbf16>
    %7 = arith.extf %6 : vector<8x128xbf16> to vector<8x128xf32>
    %8 = tpu.iota {dimensions = array<i32: 0>} : vector<8x1xi32>
    %9 = vector.broadcast %5 : i32 to vector<8x1xi32>
    %10 = arith.addi %9, %8 : vector<8x1xi32>
    %c8_i32_2 = arith.constant 8 : i32
    %11 = vector.broadcast %c8_i32_2 : i32 to vector<8x1xi32>
    %12 = arith.cmpi slt, %10, %11 : vector<8x1xi32>
    %cst = arith.constant dense<0xFF800000> : vector<8xf32>
    %13 = vector.multi_reduction <maximumf>, %7, %cst [1] : vector<8x128xf32> to vector<8xf32>
    %14 = vector.shape_cast %13 : vector<8xf32> to vector<8x1xf32>
    %15 = vector.broadcast %14 : vector<8x1xf32> to vector<8x128xf32>
    %16 = arith.subf %7, %15 : vector<8x128xf32>
    %17 = math.exp %16 : vector<8x128xf32>
    %cst_3 = arith.constant dense<0.000000e+00> : vector<8xf32>
    %18 = vector.multi_reduction <add>, %17, %cst_3 [1] : vector<8x128xf32> to vector<8xf32>
    %19 = vector.shape_cast %18 : vector<8xf32> to vector<8x1xf32>
    %20 = math.log %19 : vector<8x1xf32>
    %21 = arith.addf %14, %20 : vector<8x1xf32>
    %c0_4 = arith.constant 0 : index
    %c0_5 = arith.constant 0 : index
    %22 = vector.load %arg2[%c0_4, %c0_5] : memref<8x1xi32, #tpu.memory_space<vmem>>, vector<8x1xi32>
    %23 = tpu.iota {dimensions = array<i32: 1>} : vector<8x128xi32>
    %24 = vector.broadcast %22 : vector<8x1xi32> to vector<8x128xi32>
    %25 = arith.cmpi eq, %23, %24 : vector<8x128xi32>
    %cst_6 = arith.constant 0.000000e+00 : f32
    %26 = vector.broadcast %cst_6 : f32 to vector<8x128xf32>
    %27 = arith.select %25, %7, %26 : vector<8x128xi1>, vector<8x128xf32>
    %cst_7 = arith.constant dense<0.000000e+00> : vector<8xf32>
    %28 = vector.multi_reduction <add>, %27, %cst_7 [1] : vector<8x128xf32> to vector<8xf32>
    %29 = vector.shape_cast %28 : vector<8xf32> to vector<8x1xf32>
    %cst_8 = arith.constant dense<0.000000e+00> : vector<8xf32>
    %30 = vector.multi_reduction <add>, %7, %cst_8 [1] : vector<8x128xf32> to vector<8xf32>
    %31 = vector.shape_cast %30 : vector<8xf32> to vector<8x1xf32>
    %32 = arith.subf %29, %21 : vector<8x1xf32>
    %cst_9 = arith.constant 1.280000e+02 : f32
    %33 = vector.broadcast %cst_9 : f32 to vector<8x1xf32>
    %34 = arith.mulf %33, %21 : vector<8x1xf32>
    %35 = arith.subf %31, %34 : vector<8x1xf32>
    %cst_10 = arith.constant 0.899212599 : f32
    %36 = vector.broadcast %cst_10 : f32 to vector<8x1xf32>
    %37 = arith.mulf %36, %32 : vector<8x1xf32>
    %cst_11 = arith.constant 7.87401571E-4 : f32
    %38 = vector.broadcast %cst_11 : f32 to vector<8x1xf32>
    %39 = arith.mulf %38, %35 : vector<8x1xf32>
    %40 = arith.addf %37, %39 : vector<8x1xf32>
    %cst_12 = arith.constant 0.000000e+00 : f32
    %41 = vector.broadcast %cst_12 : f32 to vector<8x1xf32>
    %42 = arith.subf %41, %40 : vector<8x1xf32>
    %cst_13 = arith.constant 0.000000e+00 : f32
    %43 = vector.broadcast %cst_13 : f32 to vector<8x1xf32>
    %44 = arith.select %12, %42, %43 : vector<8x1xi1>, vector<8x1xf32>
    %c0_14 = arith.constant 0 : index
    %c0_15 = arith.constant 0 : index
    %45 = vector.load %arg4[%c0_14, %c0_15] : memref<8x128xf32, #tpu.memory_space<vmem>>, vector<8x128xf32>
    %cst_16 = arith.constant dense<0.000000e+00> : vector<1xf32>
    %46 = vector.multi_reduction <add>, %44, %cst_16 [0] : vector<8x1xf32> to vector<1xf32>
    %47 = vector.shape_cast %46 : vector<1xf32> to vector<1x1xf32>
    %48 = vector.broadcast %47 : vector<1x1xf32> to vector<8x128xf32>
    %49 = arith.addf %45, %48 : vector<8x128xf32>
    %c0_17 = arith.constant 0 : index
    %c0_18 = arith.constant 0 : index
    %50 = vector.load %arg4[%c0_17, %c0_18] : memref<8x128xf32, #tpu.memory_space<vmem>>, vector<8x128xf32>
    tpu.vector_store %arg4[%c0_17, %c0_18], %49 {strides = array<i32>} : memref<8x128xf32, #tpu.memory_space<vmem>>, vector<8x128xf32>,
    return
  }
  func.func @transform_0(%arg0: i32, %arg1: i32) -> (i32, i32) {
    %c1_i32 = arith.constant 1 : i32
    %0 = arith.muli %arg0, %c1_i32 : i32
    %1 = arith.addi %0, %arg1 : i32
    %c0_i32 = arith.constant 0 : i32
    %2 = arith.minsi %1, %c0_i32 : i32
    %c0_i32_0 = arith.constant 0 : i32
    %c0_i32_1 = arith.constant 0 : i32
    return %2, %c0_i32_0 : i32, i32
  }
  func.func @transform_1(%arg0: i32, %arg1: i32) -> (i32, i32) {
    %c1_i32 = arith.constant 1 : i32
    %0 = arith.muli %arg0, %c1_i32 : i32
    %1 = arith.addi %0, %arg1 : i32
    %c0_i32 = arith.constant 0 : i32
    %2 = arith.minsi %1, %c0_i32 : i32
    %c0_i32_0 = arith.constant 0 : i32
    %c0_i32_1 = arith.constant 0 : i32
    return %2, %c0_i32_0 : i32, i32
  }
  func.func @transform_2(%arg0: i32, %arg1: i32) -> (i32, i32) {
    %c0_i32 = arith.constant 0 : i32
    %c0_i32_0 = arith.constant 0 : i32
    return %arg0, %c0_i32 : i32, i32
  }
}

</mosaic_0001>

<llo_original>
// kernel: label_smoothing_loss.1
$region0: #{label_smoothing_loss.1}
  #allocation0 [shape = 'u32[]', space=smem, size = 0x4, offset = 0x4, fixed_abs, tag = 'smem constant byte address 0x4 - core index']
  #allocation1 [shape = 'u32[144,128]{1,0:T(1,128)}', space=vmem, size = 0x12000, scoped, tag = 'internal scratch']
  %s0 = inlined_call_operand.vmem [shape: s32[8,1], index: 0, kind: input, shape index: {}]
  %s1 = inlined_call_operand.vmem [shape: bf16[8,128], index: 1, kind: input, shape index: {}]
  %s2 = inlined_call_operand.vmem [shape: f32[8,128], index: 2, kind: output, shape index: {}]
  %s3 = sld [smem:[#allocation0]]
  $region22: #{label_smoothing_loss.1} parent=0
    _
  %s5 = ssub.s32 1, %s3
  %s6 = scalar_select 0, %s5, %s3
  // Predicated region
  $region2: #{label_smoothing_loss.1} parent=0 // pred_check
    _
  $region3: #{label_smoothing_loss.1} parent=0 // pred_check_branch
    %8 = sbr.rel (0) target = $region5
  $region4: #{label_smoothing_loss.1} parent=0 // pred_region
    %s9 = sadd.s32 0, 0
    %p10 = scmp.lt.s32.totalorder %s9, 0
    %s11 = scalar_select %p10, %s9, 0
    %p12 = scmp.lt.s32.totalorder %s11, 0
    %s13 = scalar_select %p12, %s11, 0
    %s14 = smul.addr %s13, 8
    %s15 = scalar_lea.vmem %s0, %s14
    %s16 = sadd.s32 0, 0
    %p17 = scmp.lt.s32.totalorder %s16, 0
    %s18 = scalar_select %p17, %s16, 0
  $region5: #{label_smoothing_loss.1} parent=0 // pred_fallthru
    _
  // Predicated region
  $region6: #{label_smoothing_loss.1} parent=0 // pred_check
    _
  $region7: #{label_smoothing_loss.1} parent=0 // pred_check_branch
    %20 = sbr.rel (0) target = $region9
  $region8: #{label_smoothing_loss.1} parent=0 // pred_region
    %s21 = sadd.s32 0, 0
    %p22 = scmp.lt.s32.totalorder %s21, 0
    %s23 = scalar_select %p22, %s21, 0
    %p24 = scmp.lt.s32.totalorder %s23, 0
    %s25 = scalar_select %p24, %s23, 0
    %s26 = smul.addr %s25, 4
    %s27 = scalar_lea.vmem %s1, %s26
    %s28 = sadd.s32 0, 0
    %p29 = scmp.lt.s32.totalorder %s28, 0
    %s30 = scalar_select %p29, %s28, 0
  $region9: #{label_smoothing_loss.1} parent=0 // pred_fallthru
    _
  %s31 = sadd.s32 0, 0
  %p32 = scmp.lt.s32.totalorder %s31, 0
  %s33 = scalar_select %p32, %s31, 0
  %p34 = scmp.lt.s32.totalorder %s33, 0
  %s35 = scalar_select %p34, %s33, 0
  %s36 = smul.addr %s35, 8
  %s37 = scalar_lea.vmem %s0, %s36
  %s38 = sadd.s32 0, 0
  %p39 = scmp.lt.s32.totalorder %s38, 0
  %s40 = scalar_select %p39, %s38, 0
  %p41 = scmp.lt.s32.totalorder %s40, 0
  %s42 = scalar_select %p41, %s40, 0
  %s43 = smul.addr %s42, 4
  %s44 = scalar_lea.vmem %s1, %s43
  %s45 = sadd.s32 0, 0
  %p46 = scmp.lt.s32.totalorder %s45, 0
  %s47 = scalar_select %p46, %s45, 0
  %p48 = scmp.lt.s32.totalorder %s47, 0
  %s49 = scalar_select %p48, %s47, 0
  %s50 = smul.addr %s49, 8
  %s51 = scalar_lea.vmem %s0, %s50
  %s52 = sadd.s32 0, 0
  %p53 = scmp.lt.s32.totalorder %s52, 0
  %s54 = scalar_select %p53, %s52, 0
  %s55 = sadd.s32 0, 0
  %p56 = scmp.lt.s32.totalorder %s55, 0
  %s57 = scalar_select %p56, %s55, 0
  %p58 = scmp.lt.s32.totalorder %s57, 0
  %s59 = scalar_select %p58, %s57, 0
  %s60 = smul.addr %s59, 4
  %s61 = scalar_lea.vmem %s1, %s60
  %s62 = sadd.s32 0, 0
  %p63 = scmp.lt.s32.totalorder %s62, 0
  %s64 = scalar_select %p63, %s62, 0
  %p65 = scmp.eq.s32.totalorder 0, 0
  // Predicated region
  $region10: #{label_smoothing_loss.1} parent=0 // pred_check
    %p66 = pneg %p65
  $region11: #{label_smoothing_loss.1} parent=0 // pred_check_branch
    %68 = sbr.rel (%p66) target = $region13
  $region12: #{label_smoothing_loss.1} parent=0 // pred_region
    %69 = vst [vmem:[%s2] sm:$0xff] 0.0
  $region13: #{label_smoothing_loss.1} parent=0 // pred_fallthru
    _
  %s70 = sadd.s32 0, 0
  %s71 = smul.u32 %s70, 8
  %v72 = vld [vmem:[%s61] sm:$0xf]
  %v73 = vunpack.c.l.bf16 %v72
  %v74 = vlaneseq
  %v75 = vshrl.u32 %v74, 7
  %v76 = vstv %s71
  %v77 = vadd.s32 %v76, %v75
  %vm78 = vcmp.lt.s32.totalorder %v77, 8
  %79 = vmax.xlane.f32.xlu0 %v73
  %v80 = vpop.xlane.xlu0 %79
  %v81 = vsub.f32 %v73, %v80
  %v82 = vmul.f32 %v81, 1.442695
  %v83 = vpow.pop %v82
  %84 = vadd.xlane.f32.xlu0 %v83
  %v85 = vpop.xlane.xlu0 %84
  %v86 = vlog2.pop %v85
  %v87 = vmul.f32 %v86, 0.6931472
  %v88 = vadd.f32 %v80, %v87
  %v89 = vld [vmem:[%s51] sm:$0xff]
  %v90 = vlaneseq
  %v91 = vand.u32 %v90, 127
  %92 = vset.pattern.permute.xlu0 0
  %93 = vperm.xlu0 %92, %v89
  %v94 = vpop.permute.xlu0 %93
  %vm95 = vcmp.eq.s32.totalorder %v91, %v94
  %v96 = vsel %vm95, %v73, 0.0
  %97 = vadd.xlane.f32.xlu0 %v96
  %v98 = vpop.xlane.xlu0 %97
  %99 = vadd.xlane.f32.xlu0 %v73
  %v100 = vpop.xlane.xlu0 %99
  %v101 = vsub.f32 %v98, %v88
  %v102 = vmul.f32 %v88, 128.0
  %v103 = vsub.f32 %v100, %v102
  %v104 = vmul.f32 %v101, 0.8992126
  %v105 = vmul.f32 %v103, 0.0007874016
  %v106 = vadd.f32 %v104, %v105
  %v107 = vsub.f32 0.0, %v106
  %v108 = vsel %vm78, %v107, 0.0
  %v109 = vld [vmem:[%s2] sm:$0xff]
  %v110 = vrot.slane %v108, 4
  %v111 = vadd.f32 %v108, %v110
  %v112 = vrot.slane %v111, 2
  %v113 = vadd.f32 %v111, %v112
  %v114 = vrot.slane %v113, 1
  %v115 = vadd.f32 %v113, %v114
  %v116 = vadd.f32 %v109, %v115
  %117 = vst [vmem:[%s2] sm:$0xff] %v116
  // Predicated region
  $region14: #{label_smoothing_loss.1} parent=0 // pred_check
    _
  $region15: #{label_smoothing_loss.1} parent=0 // pred_check_branch
    %119 = sbr.rel (0) target = $region17
  $region16: #{label_smoothing_loss.1} parent=0 // pred_region
    _
  $region17: #{label_smoothing_loss.1} parent=0 // pred_fallthru
    _
  // Predicated region
  $region18: #{label_smoothing_loss.1} parent=0 // pred_check
    _
  $region19: #{label_smoothing_loss.1} parent=0 // pred_check_branch
    %121 = sbr.rel (0) target = $region21
  $region20: #{label_smoothing_loss.1} parent=0 // pred_region
    _
  $region21: #{label_smoothing_loss.1} parent=0 // pred_fallthru
    _

</llo_original>
